<compile_context>
chip_gen: v6e
topology: v6e:2x2x1
jax: 0.10.0
libtpu: 0.0.40
codegen_flags: <defaults>
</compile_context>

<pallas_src>
import functools

import jax
import jax.numpy as jnp
from jax.experimental import pallas as pl
from jax.experimental.pallas import tpu as pltpu


def _layernorm_kernel(x_ref, alpha_ref, bias_ref, o_ref, *, eps: float, inv_dm1: float):
    """Normalizes a (tm, D) tile of independent rows along the last (lane) axis."""
    x = x_ref[...].astype(jnp.float32)

    mean = jnp.mean(x, axis=-1, keepdims=True)
    xc = x - mean
    # Unbiased variance (ddof=1), matching torch.Tensor.std's default.
    var = jnp.sum(xc * xc, axis=-1, keepdims=True) * jnp.float32(inv_dm1)
    std = jnp.sqrt(var)

    # Per-row exact reciprocal (shape (tm, 1)); eps is added to std (module spec).
    inv = pl.reciprocal(std + jnp.float32(eps), approx=False)

    o_ref[...] = (xc * inv * alpha_ref[...] + bias_ref[...]).astype(o_ref.dtype)


def _vmem_limit_bytes() -> int:
    """Scoped VMEM limit to request (single ~75% headroom factor)."""
    cap = 64 * 1024 * 1024  # conservative fallback (v7x has 64 MiB / TensorCore)
    try:
        cap = int(pltpu.get_tpu_info().vmem_capacity_bytes)
    except Exception:
        pass
    cap = max(32 * 1024 * 1024, min(cap, 128 * 1024 * 1024))
    return (cap * 3) // 4


def _pick_row_tile(rows: int, d: int, io_itemsize: int, vmem_limit_bytes: int) -> int:
    """Row-tile size for streaming a (rows, d) array through VMEM."""
    # Sublane alignment: 8 rows for 32-bit I/O, 16 for bf16 (packed sublanes).
    align = 16 if io_itemsize == 2 else 8
    if rows <= align:
        return max(rows, 1)  # single full-extent block (always a legal BlockSpec)

    # Conservative per-row VMEM working set:
    #   double-buffered input + output blocks : 4 * d * io_itemsize
    #   live f32 temporaries (x, xc, sq, out) : ~4 * d * 4
    per_row = 4 * d * io_itemsize + 16 * d
    budget = max(vmem_limit_bytes - (2 << 20), per_row)  # small reserve for alpha/bias etc.
    tm_vmem = budget // per_row

    # Per-step byte target: ~12 MiB of input per grid step keeps the ~0.35 us
    # fixed step overhead <5% and the DMA pipeline at the HBM roofline.
    tm_target = max(align, (12 << 20) // max(d * io_itemsize, 1))

    tm = min(tm_vmem, tm_target)
    tm = max(align, (tm // align) * align)

    # Keep >= 6 grid steps when the row count permits (>= 3 per TensorCore on
    # v7x, and enough steps for steady-state double buffering); fall back to
    # fewer steps only when rows are too small.
    max_steps = rows // align
    steps = min(6, max_steps)
    if steps >= 2:
        tm = min(tm, (rows // steps // align) * align)

    # Never let the block exceed the row count (largest aligned value <= rows).
    tm = min(tm, (rows // align) * align)
    return max(tm, align)


def layer_norm(x: jax.Array, alpha: jax.Array, bias: jax.Array,
               eps: float = 1e-6) -> jax.Array:
    """LayerNorm over the last axis of x with scale `alpha` and shift `bias`."""
    orig_shape = x.shape
    d = orig_shape[-1]
    rows = 1
    for s in orig_shape[:-1]:
        rows *= s
    if rows == 0 or d == 0:
        return jnp.zeros(orig_shape, x.dtype)

    # torch.Tensor.std default is the unbiased (ddof=1) estimator.
    inv_dm1 = 1.0 / float(d - 1) if d > 1 else 1.0

    x2 = x.reshape(rows, d)
    # Params passed as f32 so the kernel body does no per-tile cast.
    alpha2 = alpha.astype(jnp.float32).reshape(1, d)
    bias2 = bias.astype(jnp.float32).reshape(1, d)

    vmem_limit = _vmem_limit_bytes()
    tm = _pick_row_tile(rows, d, x2.dtype.itemsize, vmem_limit)
    grid_m = pl.cdiv(rows, tm)  # no padding: the partial edge block is clipped

    out2 = pl.pallas_call(
        functools.partial(_layernorm_kernel, eps=eps, inv_dm1=inv_dm1),
        out_shape=jax.ShapeDtypeStruct((rows, d), x.dtype),
        grid_spec=pltpu.PrefetchScalarGridSpec(
            num_scalar_prefetch=0,
            grid=(grid_m,),
            in_specs=[
                pl.BlockSpec((tm, d), lambda i: (i, 0)),   # x rows (streamed)
                pl.BlockSpec((1, d), lambda i: (0, 0)),    # alpha (resident)
                pl.BlockSpec((1, d), lambda i: (0, 0)),    # bias  (resident)
            ],
            out_specs=pl.BlockSpec((tm, d), lambda i: (i, 0)),
        ),
        compiler_params=pltpu.CompilerParams(
            dimension_semantics=("parallel",),
            vmem_limit_bytes=vmem_limit,
        ),
    )(x2, alpha2, bias2)

    return out2.reshape(orig_shape)


def layer_norm_ref(x, alpha, bias, eps=1e-6):
    """Pure-JAX reference matching the PyTorch module exactly."""
    mean = jnp.mean(x, axis=-1, keepdims=True)
    xc = x - mean
    var = jnp.sum(xc * xc, axis=-1, keepdims=True) / (x.shape[-1] - 1)
    std = jnp.sqrt(var)
    return alpha * xc / (std + eps) + bias


if __name__ == "__main__":
    key = jax.random.PRNGKey(0)
    B, S, D = 2, 8, 32  # batch, seq, d_model

    x = jax.random.normal(key, (B, S, D), dtype=jnp.float32)

    # Deterministic parameter init, same as nn.Parameter(torch.ones/zeros(d_model)).
    alpha = jnp.ones((D,), dtype=jnp.float32)
    bias = jnp.zeros((D,), dtype=jnp.float32)

    out = jax.block_until_ready(layer_norm(x, alpha, bias, eps=1e-6))
    ref = layer_norm_ref(x, alpha, bias, eps=1e-6)
    assert out.shape == x.shape
    assert jnp.allclose(out, ref, atol=1e-5, rtol=1e-5), "mismatch vs reference"

    # Ragged row count: exercises the padding-free partial edge block.
    x_r = jax.random.normal(jax.random.PRNGKey(1), (3, 5, D), dtype=jnp.float32)
    out_r = jax.block_until_ready(layer_norm(x_r, alpha, bias, eps=1e-6))
    ref_r = layer_norm_ref(x_r, alpha, bias, eps=1e-6)
    assert jnp.allclose(out_r, ref_r, atol=1e-5, rtol=1e-5), "mismatch vs reference (ragged)"

    print("KERNEL_OK")
</pallas_src>

<mosaic_0001>
module attributes {stable_mosaic.version = 11 : i64} {
  func.func @_layernorm_kernel(%arg0: i32, %arg1: memref<8x32xf32, #tpu.memory_space<vmem>>, %arg2: memref<1x32xf32, #tpu.memory_space<vmem>>, %arg3: memref<1x32xf32, #tpu.memory_space<vmem>>, %arg4: memref<8x32xf32, #tpu.memory_space<vmem>>) attributes {dimension_semantics = [#tpu.dimension_semantics<parallel>], iteration_bounds = array<i64: 2>, scalar_prefetch = 0 : i64, scratch_operands = 0 : i64, tpu.core_type = #tpu.core_type<tc>, window_params = [{transform_indices = @transform_0, window_bounds = array<i64: 8, 32>}, {pipeline_mode = #tpu.pipeline_mode<synchronous>, transform_indices = @transform_1, window_bounds = array<i64: 1, 32>}, {pipeline_mode = #tpu.pipeline_mode<synchronous>, transform_indices = @transform_2, window_bounds = array<i64: 1, 32>}, {transform_indices = @transform_3, window_bounds = array<i64: 8, 32>}]} {
    %c0 = arith.constant 0 : index
    %c0_0 = arith.constant 0 : index
    %0 = vector.load %arg1[%c0, %c0_0] : memref<8x32xf32, #tpu.memory_space<vmem>>, vector<8x32xf32>
    %cst = arith.constant dense<0.000000e+00> : vector<8xf32>
    %1 = vector.multi_reduction <add>, %0, %cst [1] : vector<8x32xf32> to vector<8xf32>
    %2 = vector.shape_cast %1 : vector<8xf32> to vector<8x1xf32>
    %cst_1 = arith.constant 3.200000e+01 : f32
    %3 = vector.broadcast %cst_1 : f32 to vector<8x1xf32>
    %4 = arith.divf %2, %3 : vector<8x1xf32>
    %5 = vector.broadcast %4 : vector<8x1xf32> to vector<8x32xf32>
    %6 = arith.subf %0, %5 : vector<8x32xf32>
    %7 = arith.mulf %6, %6 : vector<8x32xf32>
    %cst_2 = arith.constant dense<0.000000e+00> : vector<8xf32>
    %8 = vector.multi_reduction <add>, %7, %cst_2 [1] : vector<8x32xf32> to vector<8xf32>
    %9 = vector.shape_cast %8 : vector<8xf32> to vector<8x1xf32>
    %cst_3 = arith.constant 0.0322580636 : f32
    %10 = vector.broadcast %cst_3 : f32 to vector<8x1xf32>
    %11 = arith.mulf %9, %10 : vector<8x1xf32>
    %12 = math.sqrt %11 : vector<8x1xf32>
    %cst_4 = arith.constant 9.99999997E-7 : f32
    %13 = vector.broadcast %cst_4 : f32 to vector<8x1xf32>
    %14 = arith.addf %12, %13 : vector<8x1xf32>
    %15 = tpu.reciprocal %14 : vector<8x1xf32> -> vector<8x1xf32>
    %16 = vector.broadcast %15 : vector<8x1xf32> to vector<8x32xf32>
    %17 = arith.mulf %6, %16 : vector<8x32xf32>
    %c0_5 = arith.constant 0 : index
    %c0_6 = arith.constant 0 : index
    %18 = vector.load %arg2[%c0_5, %c0_6] : memref<1x32xf32, #tpu.memory_space<vmem>>, vector<1x32xf32>
    %19 = vector.broadcast %18 : vector<1x32xf32> to vector<8x32xf32>
    %20 = arith.mulf %17, %19 : vector<8x32xf32>
    %c0_7 = arith.constant 0 : index
    %c0_8 = arith.constant 0 : index
    %21 = vector.load %arg3[%c0_7, %c0_8] : memref<1x32xf32, #tpu.memory_space<vmem>>, vector<1x32xf32>
    %22 = vector.broadcast %21 : vector<1x32xf32> to vector<8x32xf32>
    %23 = arith.addf %20, %22 : vector<8x32xf32>
    %c0_9 = arith.constant 0 : index
    %c0_10 = arith.constant 0 : index
    %24 = vector.load %arg4[%c0_9, %c0_10] : memref<8x32xf32, #tpu.memory_space<vmem>>, vector<8x32xf32>
    tpu.vector_store %arg4[%c0_9, %c0_10], %23 {strides = array<i32>} : memref<8x32xf32, #tpu.memory_space<vmem>>, vector<8x32xf32>,
    return
  }
  func.func @transform_0(%arg0: i32) -> (i32, i32) {
    %c0_i32 = arith.constant 0 : i32
    %c0_i32_0 = arith.constant 0 : i32
    return %arg0, %c0_i32 : i32, i32
  }
  func.func @transform_1(%arg0: i32) -> (i32, i32) {
    %c0_i32 = arith.constant 0 : i32
    %c0_i32_0 = arith.constant 0 : i32
    %c0_i32_1 = arith.constant 0 : i32
    return %c0_i32, %c0_i32_0 : i32, i32
  }
  func.func @transform_2(%arg0: i32) -> (i32, i32) {
    %c0_i32 = arith.constant 0 : i32
    %c0_i32_0 = arith.constant 0 : i32
    %c0_i32_1 = arith.constant 0 : i32
    return %c0_i32, %c0_i32_0 : i32, i32
  }
  func.func @transform_3(%arg0: i32) -> (i32, i32) {
    %c0_i32 = arith.constant 0 : i32
    %c0_i32_0 = arith.constant 0 : i32
    return %arg0, %c0_i32 : i32, i32
  }
}

</mosaic_0001>

<llo_original>
// kernel: tpu_custom_call.1
$region0: #{tpu_custom_call.1}
  #allocation0 [shape = 'u32[]', space=smem, size = 0x4, offset = 0x4, fixed_abs, tag = 'smem constant byte address 0x4 - core index']
  #allocation1 [shape = 'u32[144,128]{1,0:T(1,128)}', space=vmem, size = 0x12000, scoped, tag = 'internal scratch']
  %s0 = inlined_call_operand.hbm [shape: f32[16,32], index: 0, kind: input, shape index: {}]
  %s1 = inlined_call_operand.vmem [shape: f32[1,32], index: 1, kind: input, shape index: {}]
  %s2 = inlined_call_operand.vmem [shape: f32[1,32], index: 2, kind: input, shape index: {}]
  %s3 = inlined_call_operand.hbm [shape: f32[16,32], index: 3, kind: output, shape index: {}]
  %s4 = sld [smem:[#allocation0]]
  $region49: #{tpu_custom_call.1} parent=0
    _
  %s6 = ssub.s32 1, %s4
  %s7 = scalar_select 0, %s6, %s4
  $region1: #{tpu_custom_call.1} parent=0
    #allocation2 [shape = 'u8[8192]{0}', space=vmem, size = 0x2000, scoped, tag = 'input window, operand 0']
    #allocation3 [shape = 's32[2]{0}', space=sflag, size = 0x8, scoped, tag = 'scoped memory for tpu_custom_call.1']
    #allocation4 [shape = 's32[2]{0}', space=sflag, size = 0x8, scoped, tag = 'scoped memory for tpu_custom_call.1']
    #allocation5 [shape = 'u8[8192]{0}', space=vmem, size = 0x2000, scoped, tag = 'output window, operand 0']
    %8 = vsyncpa [#allocation3], 0
    %s9 = scalar_lea.sflag [#allocation3], 1
    %10 = vsyncpa %s9, 0
    %11 = vsyncpa [#allocation4], 0
    %s12 = scalar_lea.sflag [#allocation4], 1
    %13 = vsyncpa %s12, 0
    loop: start=0, step=1, limit=4
    $region2: #{tpu_custom_call.1} parent=1 // loop_pre_header
      _
    $region3: #{tpu_custom_call.1} parent=1 // loop_header
      %s15 = sphi 0, %s19
      %p16 = scmp.ge.s32.totalorder %s15, 4
      %s25 = sphi 0, %s27
      %s28 = sphi 0, %s25
      %s29 = sphi 0, %s28
      %s45 = sphi 0, %s29
      %s49 = sphi 0, %s49
      %s51 = sphi 0, %s49
      %s52 = sphi 0, %s51
      %s66 = sphi 0, %s52
      %s70 = sphi 0, %s70
      %s72 = sphi 0, %s70
      %s73 = sphi 0, %s72
      %s87 = sphi 0, %s73
      %s93 = sphi 0, %s95
      %s96 = sphi 0, %s93
      %s97 = sphi 0, %s96
      %s113 = sphi 0, %s97
    $region4: #{tpu_custom_call.1} parent=1 // loop_header_branch
      %18 = sbr.rel (%p16) target = $region8
    $region5: #{tpu_custom_call.1} parent=1 // loop_body
      %s20 = ssub.s32 %s15, 1
      %s21 = ssub.s32 %s15, 2
      %s22 = sadd.s32 %s15, 1
      %s23 = ssub.s32 %s15, %s22
      %p24 = scmp.eq.s32.totalorder %s23, 0
      %s26 = sadd.s32 %s25, 1
      %s27 = scalar_select %p24, %s25, %s26
      %p30 = pneg %p24
      %p31 = scmp.eq.s32.totalorder %s15, 1
      %p32 = por %p30, %p31
      %p33 = scmp.ne.s32.totalorder %s25, %s28
      %p34 = scmp.eq.s32.totalorder %s15, 0
      %p35 = por %p33, %p34
      %p36 = scmp.ne.s32.totalorder %s25, %s28
      %p37 = scmp.eq.s32.totalorder %s20, 1
      %p38 = por %p36, %p37
      %p39 = scmp.ne.s32.totalorder %s28, %s29
      %p40 = scmp.eq.s32.totalorder %s20, 0
      %p41 = por %p39, %p40
      %p42 = scmp.ne.s32.totalorder %s28, %s29
      %p43 = scmp.eq.s32.totalorder %s21, 1
      %p44 = por %p42, %p43
      %p46 = scmp.ne.s32.totalorder %s29, %s45
      %p47 = scmp.eq.s32.totalorder %s21, 0
      %p48 = por %p46, %p47
      %s50 = sadd.s32 %s49, 1
      %p53 = scmp.eq.s32.totalorder %s15, 1
      %p54 = scmp.ne.s32.totalorder %s49, %s51
      %p55 = scmp.eq.s32.totalorder %s15, 0
      %p56 = por %p54, %p55
      %p57 = scmp.ne.s32.totalorder %s49, %s51
      %p58 = scmp.eq.s32.totalorder %s20, 1
      %p59 = por %p57, %p58
      %p60 = scmp.ne.s32.totalorder %s51, %s52
      %p61 = scmp.eq.s32.totalorder %s20, 0
      %p62 = por %p60, %p61
      %p63 = scmp.ne.s32.totalorder %s51, %s52
      %p64 = scmp.eq.s32.totalorder %s21, 1
      %p65 = por %p63, %p64
      %p67 = scmp.ne.s32.totalorder %s52, %s66
      %p68 = scmp.eq.s32.totalorder %s21, 0
      %p69 = por %p67, %p68
      %s71 = sadd.s32 %s70, 1
      %p74 = scmp.eq.s32.totalorder %s15, 1
      %p75 = scmp.ne.s32.totalorder %s70, %s72
      %p76 = scmp.eq.s32.totalorder %s15, 0
      %p77 = por %p75, %p76
      %p78 = scmp.ne.s32.totalorder %s70, %s72
      %p79 = scmp.eq.s32.totalorder %s20, 1
      %p80 = por %p78, %p79
      %p81 = scmp.ne.s32.totalorder %s72, %s73
      %p82 = scmp.eq.s32.totalorder %s20, 0
      %p83 = por %p81, %p82
      %p84 = scmp.ne.s32.totalorder %s72, %s73
      %p85 = scmp.eq.s32.totalorder %s21, 1
      %p86 = por %p84, %p85
      %p88 = scmp.ne.s32.totalorder %s73, %s87
      %p89 = scmp.eq.s32.totalorder %s21, 0
      %p90 = por %p88, %p89
      %s91 = ssub.s32 %s15, %s22
      %p92 = scmp.eq.s32.totalorder %s91, 0
      %s94 = sadd.s32 %s93, 1
      %s95 = scalar_select %p92, %s93, %s94
      %p98 = pneg %p92
      %p99 = scmp.eq.s32.totalorder %s15, 1
      %p100 = por %p98, %p99
      %p101 = scmp.ne.s32.totalorder %s93, %s96
      %p102 = scmp.eq.s32.totalorder %s15, 0
      %p103 = por %p101, %p102
      %p104 = scmp.ne.s32.totalorder %s93, %s96
      %p105 = scmp.eq.s32.totalorder %s20, 1
      %p106 = por %p104, %p105
      %p107 = scmp.ne.s32.totalorder %s96, %s97
      %p108 = scmp.eq.s32.totalorder %s20, 0
      %p109 = por %p107, %p108
      %p110 = scmp.ne.s32.totalorder %s96, %s97
      %p111 = scmp.eq.s32.totalorder %s21, 1
      %p112 = por %p110, %p111
      %p114 = scmp.ne.s32.totalorder %s97, %s113
      %p115 = scmp.eq.s32.totalorder %s21, 0
      %p116 = por %p114, %p115
      %p117 = scmp.le.s32.totalorder 1, %s15
      %p118 = scmp.lt.s32.totalorder %s15, 3
      %p119 = pnand %p117, %p118
      %p120 = pneg %p119
      // Predicated region
      $region9: #{tpu_custom_call.1} parent=5 // pred_check
        _
      $region10: #{tpu_custom_call.1} parent=5 // pred_check_branch
        %122 = sbr.rel (%p119) target = $region12
      $region11: #{tpu_custom_call.1} parent=5 // pred_region
        %s123 = ssub.s32 %s15, 1
        // Predicated region
        $region13: #{tpu_custom_call.1} parent=11 // pred_check
          %p124 = pneg %p62
        $region14: #{tpu_custom_call.1} parent=11 // pred_check_branch
          %126 = sbr.rel (%p124) target = $region16
        $region15: #{tpu_custom_call.1} parent=11 // pred_region
          _
        $region16: #{tpu_custom_call.1} parent=11 // pred_fallthru
          _
        // Predicated region
        $region17: #{tpu_custom_call.1} parent=11 // pred_check
          %p127 = pneg %p83
        $region18: #{tpu_custom_call.1} parent=11 // pred_check_branch
          %129 = sbr.rel (%p127) target = $region20
        $region19: #{tpu_custom_call.1} parent=11 // pred_region
          _
        $region20: #{tpu_custom_call.1} parent=11 // pred_fallthru
          _
      $region12: #{tpu_custom_call.1} parent=5 // pred_fallthru
        _
      %p130 = scmp.lt.s32.totalorder %s15, 2
      // Predicated region
      $region21: #{tpu_custom_call.1} parent=5 // pred_check
        %p131 = pneg %p130
      $region22: #{tpu_custom_call.1} parent=5 // pred_check_branch
        %133 = sbr.rel (%p131) target = $region24
      $region23: #{tpu_custom_call.1} parent=5 // pred_region
        // Predicated region
        $region25: #{tpu_custom_call.1} parent=23 // pred_check
          %p134 = pneg %p35
        $region26: #{tpu_custom_call.1} parent=23 // pred_check_branch
          %136 = sbr.rel (%p134) target = $region28
        $region27: #{tpu_custom_call.1} parent=23 // pred_region
          %s137 = sand.u32 %s25, 1
          %s138 = scalar_lea.sflag [#allocation3], %s137
          %s139 = sand.u32 %s25, 1
          %s140 = smul.addr %s139, 8
          %s141 = scalar_lea.vmem [#allocation2], %s140
          %s143 = ssub.s32 128, 128
          %144 = vsyncadd %s138, %s143
          %s145 = smul.addr %s15, 128
          %s146 = scalar_lea.hbm %s0, %s145
          %s148 = sshll.u32 %s141, 4
          %s149 = int_to_ptr.vmem [resolvable:$true] %s148
          %151 = dma.hbm_to_vmem [thread:$0]  %s146, 128, %s149, %s138
        $region28: #{tpu_custom_call.1} parent=23 // pred_fallthru
          _
      $region24: #{tpu_custom_call.1} parent=5 // pred_fallthru
        _
      %p152 = scmp.le.s32.totalorder 1, %s15
      %p153 = scmp.lt.s32.totalorder %s15, 3
      %p154 = pnand %p152, %p153
      %p155 = pneg %p154
      // Predicated region
      $region29: #{tpu_custom_call.1} parent=5 // pred_check
        _
      $region30: #{tpu_custom_call.1} parent=5 // pred_check_branch
        %157 = sbr.rel (%p154) target = $region32
      $region31: #{tpu_custom_call.1} parent=5 // pred_region
        %s158 = ssub.s32 %s15, 1
        %s159 = sand.u32 %s28, 1
        %s160 = scalar_lea.sflag [#allocation3], %s159
        %s161 = sand.u32 %s28, 1
        %s162 = smul.addr %s161, 8
        %s163 = scalar_lea.vmem [#allocation2], %s162
        // Predicated region
        $region33: #{tpu_custom_call.1} parent=31 // pred_check
          %p164 = pneg %p41
        $region34: #{tpu_custom_call.1} parent=31 // pred_check_branch
          %166 = sbr.rel (%p164) target = $region36
        $region35: #{tpu_custom_call.1} parent=31 // pred_region
          %167 = dma.done %s160, 128
        $region36: #{tpu_custom_call.1} parent=31 // pred_fallthru
          _
        %s168 = sand.u32 %s28, 1
        %s169 = scalar_lea.sflag [#allocation3], %s168
        %s170 = sand.u32 %s28, 1
        %s171 = smul.addr %s170, 8
        %s172 = scalar_lea.vmem [#allocation2], %s171
        %p173 = pneg %p41
        %p174 = pneg %p38
        %p175 = pneg %p62
        %p176 = pneg %p59
        %p177 = pneg %p83
        %p178 = pneg %p80
        %p179 = pneg %p109
        %p180 = pneg %p106
        %s181 = sand.u32 %s96, 1
        %s182 = scalar_lea.sflag [#allocation4], %s181
        %s183 = sand.u32 %s96, 1
        %s184 = smul.addr %s183, 8
        %s185 = scalar_lea.vmem [#allocation5], %s184
        %v186 = vld [vmem:[%s163] sm:$0xff]
        %vm187 = vcmask 261120
        %v188 = vsel %vm187, %v186, 0.0
        %189 = vadd.xlane.f32.xlu0 %v188
        %v190 = vpop.xlane.xlu0 %189
        %v191 = vrcp.pop 32.0
        %v192 = vmul.f32 %v190, %v191
        %v193 = vsub.f32 %v186, %v192
        %v194 = vmul.f32 %v193, %v193
        %v195 = vsel %vm187, %v194, 0.0
        %196 = vadd.xlane.f32.xlu0 %v195
        %v197 = vpop.xlane.xlu0 %196
        %v198 = vmul.f32 %v197, 0.032258064
        %v199 = vrsqrt.pop %v198
        %v200 = vmul.f32 %v198, %v199
        %vm201 = vcmp.eq.f32.partialorder %v198, inf
        %v202 = vsel %vm201, %v198, %v200
        %vm203 = vcmp.eq.f32.partialorder %v198, 0.0
        %v204 = vand.u32 %v198, 2147483648
        %v205 = vsel %vm203, %v204, %v202
        %v206 = vadd.f32 %v205, 1e-06
        %v207 = vrcp.pop %v206
        %v208 = vmul.f32 %v193, %v207
        %v209 = vld [vmem:[%s1] sm:$0x1]
        %v211 = vlaneseq
        %v212 = vshrl.u32 %v211, 7
        %v213 = vsub.s32 0, %v212
        %v214 = vrot.slane %v209, %v213
        %v216 = vmul.f32 %v208, %v214
        %v217 = vld [vmem:[%s2] sm:$0x1]
        %v219 = vlaneseq
        %v220 = vshrl.u32 %v219, 7
        %v221 = vsub.s32 0, %v220
        %v222 = vrot.slane %v217, %v221
        %v224 = vadd.f32 %v216, %v222
        %225 = vst.msk [vmem:[%s185] sm:$0xff] %vm187, %v224
        %s226 = sand.u32 %s96, 1
        %s227 = scalar_lea.sflag [#allocation4], %s226
        %s228 = sand.u32 %s96, 1
        %s229 = smul.addr %s228, 8
        %s230 = scalar_lea.vmem [#allocation5], %s229
        // Predicated region
        $region37: #{tpu_custom_call.1} parent=31 // pred_check
          %p231 = pneg %p106
        $region38: #{tpu_custom_call.1} parent=31 // pred_check_branch
          %233 = sbr.rel (%p231) target = $region40
        $region39: #{tpu_custom_call.1} parent=31 // pred_region
          %s235 = ssub.s32 128, 128
          %236 = vsyncadd %s227, %s235
          %s237 = smul.addr %s20, 128
          %s238 = scalar_lea.hbm %s3, %s237
          %s240 = sshll.u32 %s230, 4
          %s241 = int_to_ptr.vmem [resolvable:$true] %s240
          %243 = dma.vmem_to_hbm [thread:$0]  %s241, 128, %s238, %s227
        $region40: #{tpu_custom_call.1} parent=31 // pred_fallthru
          _
      $region32: #{tpu_custom_call.1} parent=5 // pred_fallthru
        _
      %p244 = scmp.le.s32.totalorder 2, %s15
      // Predicated region
      $region41: #{tpu_custom_call.1} parent=5 // pred_check
        %p245 = pneg %p244
      $region42: #{tpu_custom_call.1} parent=5 // pred_check_branch
        %247 = sbr.rel (%p245) target = $region44
      $region43: #{tpu_custom_call.1} parent=5 // pred_region
        %s248 = ssub.s32 %s15, 2
        // Predicated region
        $region45: #{tpu_custom_call.1} parent=43 // pred_check
          %p249 = pneg %p112
        $region46: #{tpu_custom_call.1} parent=43 // pred_check_branch
          %251 = sbr.rel (%p249) target = $region48
        $region47: #{tpu_custom_call.1} parent=43 // pred_region
          %s252 = sand.u32 %s97, 1
          %s253 = scalar_lea.sflag [#allocation4], %s252
          %s254 = sand.u32 %s97, 1
          %s255 = smul.addr %s254, 8
          %s256 = scalar_lea.vmem [#allocation5], %s255
          %257 = dma.done %s253, 128
        $region48: #{tpu_custom_call.1} parent=43 // pred_fallthru
          _
      $region44: #{tpu_custom_call.1} parent=5 // pred_fallthru
        _
    $region6: #{tpu_custom_call.1} parent=1 // loop_footer
      %s19 = sadd.s32 1, %s15
    $region7: #{tpu_custom_call.1} parent=1 // loop_footer_branch
      %14 = sbr.rel target = $region3
    $region8: #{tpu_custom_call.1} parent=1 // loop_exit
      _
    %258 = vsyncpa [#allocation3], 1
    %s259 = scalar_lea.sflag [#allocation3], 1
    %260 = vsyncpa %s259, 1
    %261 = vsyncpa [#allocation4], 1
    %s262 = scalar_lea.sflag [#allocation4], 1
    %263 = vsyncpa %s262, 1

</llo_original>
